<compile_context>
chip_gen: v7x
topology: tpu7x:2x2x1
jax: 0.10.0
libtpu: 0.0.40
codegen_flags: <defaults>
</compile_context>

<pallas_src>
import functools

import jax
import jax.numpy as jnp
from jax.experimental import pallas as pl
from jax.experimental.pallas import tpu as pltpu


# ----------------------------------------------------------------------------
# Tiling heuristics
# ----------------------------------------------------------------------------
_LANE = 128
_MIN_PALLAS_BYTES = 128 * 1024          # below this, XLA's fused reduce wins


def _round_up(x: int, m: int) -> int:
    return ((x + m - 1) // m) * m


def _vmem_budget():
    """Generation-aware (per-input-block byte budget, vmem_limit_bytes|None)."""
    try:
        cap = int(pltpu.get_tpu_info().vmem_capacity_bytes)
    except Exception:                   # interpret mode / unknown hardware
        cap = 0
    if cap >= 96 * 1024 * 1024:         # v5e / v6e class: 128 MiB physical VMEM
        return 8 * 1024 * 1024, 64 * 1024 * 1024
    if cap >= 48 * 1024 * 1024:         # v7x class: 64 MiB physical VMEM
        return 10 * 1024 * 1024, 44 * 1024 * 1024
    return 4 * 1024 * 1024, None        # unknown: stay under scoped default


def _choose_tiles(B: int, N: int, D: int, dtype, budget: int):
    itemsize = jnp.dtype(dtype).itemsize
    pack = max(8, 32 // itemsize)       # sublane packing: 8 f32 / 16 bf16

    # Feature (lane) tile: full D, or the largest 128-multiple that divides D.
    if D <= _LANE or D % _LANE != 0:
        td = D                          # block equals the full dim (allowed)
    else:
        cap = min(D, 2048)
        td = _LANE
        t = _LANE
        while t <= cap:
            if D % t == 0:
                td = t
            t += _LANE
    td_padded = _round_up(td, _LANE)

    # Single-step preference: does a whole reduction column fit the budget?
    row_bytes = td_padded * itemsize
    col_bytes = _round_up(N, pack) * row_bytes
    if col_bytes <= budget:
        tn = N
        tb = max(1, min(B, budget // col_bytes))
    else:
        tb = min(B, 8)
        tn = (budget // (tb * row_bytes)) // pack * pack
        tn = max(pack, min(tn, N))
        if tn >= N:
            tn = N

    # Megacore: keep >= 2 parallel (b, d) tiles when possible so both
    # TensorCores (v7x) drive HBM.  tb is a leading block dim (output blocks
    # are (tb, 1, td)), so it is not subject to the (8,128) sublane rule.
    if pl.cdiv(B, tb) * pl.cdiv(D, td) < 2:
        if B >= 2:
            tb = pl.cdiv(B, 2)
        elif td > _LANE and (td // 2) % _LANE == 0:
            td = td // 2
        # TODO(synk): split-k across cores for B == 1, D <= 128 shapes.

    return tb, tn, td, pack


# ----------------------------------------------------------------------------
# Pallas kernels: sum over axis 1 with f32 accumulation.
# ----------------------------------------------------------------------------
def _sum_axis1_single_kernel(x_ref, o_ref):
    # Whole reduction column in one block: no k axis, no scratch, one store.
    o_ref[...] = jnp.sum(
        x_ref[...], axis=1, keepdims=True, dtype=jnp.float32
    ).astype(o_ref.dtype)


def _sum_axis1_multi_kernel(x_ref, o_ref, acc_ref, *, n_rem):
    # x_ref: (tb, tn, td) input tile; o_ref / acc_ref: (tb, 1, td).
    k = pl.program_id(2)
    last = pl.num_programs(2) - 1

    @pl.when(k == 0)
    def _():
        acc_ref[...] = jnp.zeros_like(acc_ref)

    if n_rem == 0:
        acc_ref[...] += jnp.sum(x_ref[...], axis=1, keepdims=True,
                                dtype=jnp.float32)
    else:
        # Ragged final tile: only the last step pays for the partial read;
        # every other step is a plain unmasked fused sum.
        @pl.when(k != last)
        def _():
            acc_ref[...] += jnp.sum(x_ref[...], axis=1, keepdims=True,
                                    dtype=jnp.float32)

        @pl.when(k == last)
        def _():
            acc_ref[...] += jnp.sum(x_ref[:, :n_rem, :], axis=1, keepdims=True,
                                    dtype=jnp.float32)

    @pl.when(k == last)
    def _():
        o_ref[...] = acc_ref[...].astype(o_ref.dtype)


def _pallas_sum_axis1(x: jax.Array, out_dtype, n_tile=None) -> jax.Array:
    """sum over axis 1 of a (B, N, D) array, reduction inside a Pallas kernel."""
    B, N, D = x.shape
    budget, vmem_limit = _vmem_budget()
    tb, tn, td, pack = _choose_tiles(B, N, D, x.dtype, budget)

    if n_tile is not None:
        # Explicit override (used by tests): keep it (8,128)-legal for dtype.
        tn = int(n_tile)
        if tn < N:
            tn = max(pack, (tn // pack) * pack)
        else:
            tn = N

    itemsize = jnp.dtype(x.dtype).itemsize
    cost = pl.CostEstimate(
        flops=B * N * D,
        transcendentals=0,
        bytes_accessed=B * N * D * itemsize + B * D * jnp.dtype(out_dtype).itemsize,
    )

    if tn >= N:
        # Single-step reduction: 2-D grid, no scratch accumulator.
        grid = (pl.cdiv(B, tb), pl.cdiv(D, td))
        in_specs = [pl.BlockSpec((tb, N, td), lambda b, d: (b, 0, d))]
        out_specs = pl.BlockSpec((tb, 1, td), lambda b, d: (b, 0, d))
        kernel = _sum_axis1_single_kernel
        scratch = []
        sems = ("parallel", "parallel")
    else:
        # Multi-step reduction: reduction axis innermost, f32 scratch, single
        # final store.  Ragged B / D tiles are safe: padded input rows/lanes
        # only feed padded output rows/lanes, which Pallas discards.
        grid = (pl.cdiv(B, tb), pl.cdiv(D, td), pl.cdiv(N, tn))
        in_specs = [pl.BlockSpec((tb, tn, td), lambda b, d, k: (b, k, d))]
        out_specs = pl.BlockSpec((tb, 1, td), lambda b, d, k: (b, 0, d))
        kernel = functools.partial(_sum_axis1_multi_kernel, n_rem=N % tn)
        scratch = [pltpu.VMEM((tb, 1, td), jnp.float32)]
        sems = ("parallel", "parallel", "arbitrary")

    cp = dict(dimension_semantics=sems)
    if vmem_limit is not None:
        cp["vmem_limit_bytes"] = vmem_limit

    out = pl.pallas_call(
        kernel,
        out_shape=jax.ShapeDtypeStruct((B, 1, D), out_dtype),
        grid=grid,
        in_specs=in_specs,
        out_specs=out_specs,
        scratch_shapes=scratch,
        compiler_params=pltpu.CompilerParams(**cp),
        cost_estimate=cost,
    )(x)
    return out.reshape(B, D)


def sum_reduce(x: jax.Array, dim: int) -> jax.Array:
    """JAX equivalent of torch.sum(x, dim=dim); the 3-D dim=1 case uses Pallas."""
    x = jnp.asarray(x)
    dim = dim % x.ndim
    nbytes = x.size * jnp.dtype(x.dtype).itemsize
    use_pallas = (
        x.ndim == 3
        and dim == 1
        and jnp.dtype(x.dtype) in (jnp.dtype(jnp.float32), jnp.dtype(jnp.bfloat16))
        and nbytes >= _MIN_PALLAS_BYTES
    )
    if not use_pallas:
        # TODO(synk): other (ndim, dim) combos and int/f64 dtypes use plain jnp.sum.
        return jnp.sum(x, axis=dim)

    B, N, D = x.shape
    if D < _LANE and _LANE % D == 0:
        # Lane-dense layout for narrow feature dims: fold g reduction rows into
        # the lane axis via a free reshape so the kernel's output slab is a
        # multiple of 128 lanes; finish the tiny g-way fold in plain jnp.
        base = _LANE // D
        for mult in (4, 2, 1):
            g = base * mult
            if N % g == 0:
                folded = x.reshape(B, N // g, g * D)
                part = _pallas_sum_axis1(folded, jnp.float32)     # (B, g*D)
                return part.reshape(B, g, D).sum(axis=1).astype(x.dtype)
        # No friendly fold (e.g. prime N): run the lane-dense kernel on the
        # largest divisible prefix and finish the < g remainder rows in jnp.
        g = base
        prefix = (N // g) * g
        if prefix >= g:
            folded = x[:, :prefix, :].reshape(B, prefix // g, g * D)
            part = _pallas_sum_axis1(folded, jnp.float32)         # (B, g*D)
            main = part.reshape(B, g, D).sum(axis=1)
            rem = jnp.sum(x[:, prefix:, :].astype(jnp.float32), axis=1)
            return (main + rem).astype(x.dtype)
        return jnp.sum(x, axis=1)

    return _pallas_sum_axis1(x, x.dtype)


# ----------------------------------------------------------------------------
# ModuleWrap: exact forward-pass semantics of the PyTorch module.
# ----------------------------------------------------------------------------
class ModuleWrap:
    """
    Wrap a function into a module-like callable, with possible *args / **kwargs.

    forward(*args, **kwargs) == func(*self.args, *args, **self.kwargs, **kwargs)
    """

    def __init__(self, func, *args, **kwargs) -> None:
        self.func = func
        self.__name__ = f"ModuleWrap({self.func.__name__})"
        self.args = args
        self.kwargs = kwargs

    def forward(self, *args, **kwargs):
        return self.func(*self.args, *args, **self.kwargs, **kwargs)

    def __call__(self, *args, **kwargs):
        return self.forward(*args, **kwargs)

    def __repr__(self):
        return self.__name__


# ----------------------------------------------------------------------------
if __name__ == "__main__":
    key = jax.random.PRNGKey(0)
    k1, k2, k3, k4, k5 = jax.random.split(key, 5)

    # ModuleWrap(torch.sum, dim=1) equivalent.
    module = ModuleWrap(sum_reduce, dim=1)

    # Case 1: tiny demo shape -> size-threshold fallback (plain jnp.sum).
    x1 = jax.random.normal(k1, (2, 16, 32), dtype=jnp.float32)
    out1 = jax.block_until_ready(module(x1))
    ref1 = jnp.sum(x1, axis=1)
    assert out1.shape == (2, 32) and out1.dtype == x1.dtype
    assert jnp.allclose(out1, ref1, atol=1e-5, rtol=1e-5)

    # Case 2: f32, lane-dense D (multiple of 128) -> single-step Pallas path
    # with the megacore B split (2 parallel b-tiles).
    x2 = jax.random.normal(k2, (4, 384, 128), dtype=jnp.float32)
    out2 = jax.block_until_ready(module(x2))
    ref2 = jnp.sum(x2, axis=1)
    assert out2.shape == (4, 128) and out2.dtype == x2.dtype
    assert jnp.allclose(out2, ref2, atol=1e-3, rtol=1e-5)

    # Case 3: bf16, narrow D -> lane-fold path with f32 accumulation.
    x3 = jax.random.normal(k3, (8, 512, 32), dtype=jnp.bfloat16)
    out3 = jax.block_until_ready(module(x3))
    ref3 = jnp.sum(x3.astype(jnp.float32), axis=1).astype(jnp.bfloat16)
    assert out3.shape == (8, 32) and out3.dtype == x3.dtype
    assert jnp.allclose(
        out3.astype(jnp.float32), ref3.astype(jnp.float32), atol=2.5e-1, rtol=2e-2
    )

    # Case 4: ragged N with a forced small reduction tile -> exercises the
    # multi-step accumulator and the gated ragged-tail partial read.
    x4 = jax.random.normal(k4, (4, 100, 128), dtype=jnp.float32)
    out4 = jax.block_until_ready(_pallas_sum_axis1(x4, x4.dtype, n_tile=48))
    ref4 = jnp.sum(x4, axis=1)
    assert out4.shape == (4, 128) and out4.dtype == x4.dtype
    assert jnp.allclose(out4, ref4, atol=1e-3, rtol=1e-5)

    # Case 5: narrow D with no friendly fold (N = 257) -> lane-dense prefix in
    # Pallas plus a tiny jnp remainder.
    x5 = jax.random.normal(k5, (4, 257, 32), dtype=jnp.float32)
    out5 = jax.block_until_ready(module(x5))
    ref5 = jnp.sum(x5, axis=1)
    assert out5.shape == (4, 32) and out5.dtype == x5.dtype
    assert jnp.allclose(out5, ref5, atol=1e-3, rtol=1e-5)

    print("KERNEL_OK")
</pallas_src>

<mosaic_0001>
module attributes {stable_mosaic.version = 11 : i64} {
  func.func @_sum_axis1_single_kernel(%arg0: i32, %arg1: i32, %arg2: memref<2x384x128xf32, #tpu.memory_space<vmem>>, %arg3: memref<2x1x128xf32, #tpu.memory_space<vmem>>) attributes {dimension_semantics = [#tpu.dimension_semantics<parallel>, #tpu.dimension_semantics<parallel>], iteration_bounds = array<i64: 2, 1>, scalar_prefetch = 0 : i64, scratch_operands = 0 : i64, tpu.core_type = #tpu.core_type<tc>, window_params = [{transform_indices = @transform_0, window_bounds = array<i64: 2, 384, 128>}, {transform_indices = @transform_1, window_bounds = array<i64: 2, 1, 128>}]} {
    %c0 = arith.constant 0 : index
    %c0_0 = arith.constant 0 : index
    %c0_1 = arith.constant 0 : index
    %0 = vector.load %arg2[%c0, %c0_0, %c0_1] : memref<2x384x128xf32, #tpu.memory_space<vmem>>, vector<2x384x128xf32>
    %cst = arith.constant dense<0.000000e+00> : vector<2x128xf32>
    %1 = vector.multi_reduction <add>, %0, %cst [1] : vector<2x384x128xf32> to vector<2x128xf32>
    %2 = vector.shape_cast %1 : vector<2x128xf32> to vector<2x1x128xf32>
    %c0_2 = arith.constant 0 : index
    %c0_3 = arith.constant 0 : index
    %c0_4 = arith.constant 0 : index
    %3 = vector.load %arg3[%c0_2, %c0_3, %c0_4] : memref<2x1x128xf32, #tpu.memory_space<vmem>>, vector<2x1x128xf32>
    tpu.vector_store %arg3[%c0_2, %c0_3, %c0_4], %2 {strides = array<i32>} : memref<2x1x128xf32, #tpu.memory_space<vmem>>, vector<2x1x128xf32>,
    return
  }
  func.func @transform_0(%arg0: i32, %arg1: i32) -> (i32, i32, i32) {
    %c0_i32 = arith.constant 0 : i32
    %c0_i32_0 = arith.constant 0 : i32
    return %arg0, %c0_i32, %arg1 : i32, i32, i32
  }
  func.func @transform_1(%arg0: i32, %arg1: i32) -> (i32, i32, i32) {
    %c0_i32 = arith.constant 0 : i32
    %c0_i32_0 = arith.constant 0 : i32
    return %arg0, %c0_i32, %arg1 : i32, i32, i32
  }
}

</mosaic_0001>

<llo_original>
// kernel: tpu_custom_call.1
$region0: #{tpu_custom_call.1}
  #allocation0 [shape = 'u32[]', space=smem, size = 0x4, offset = 0x4, fixed_abs, tag = 'smem constant byte address 0x4 - core index']
  #allocation1 [shape = 'u32[144,128]{1,0:T(1,128)}', space=vmem, size = 0x12000, scoped, tag = 'internal scratch']
  %s0 = inlined_call_operand.hbm [shape: f32[4,384,128], index: 0, kind: input, shape index: {}]
  %s1 = inlined_call_operand.hbm [shape: f32[4,1,128], index: 1, kind: output, shape index: {}]
  %s2 = sld [smem:[#allocation0]]
  $region41: #{tpu_custom_call.1} parent=0
    _
  %s4 = ssub.s32 1, %s2
  %s5 = scalar_select 0, %s4, %s2
  $region1: #{tpu_custom_call.1} parent=0
    #allocation2 [shape = 'u8[786432]{0}', space=vmem, size = 0xc0000, scoped, tag = 'input window, operand 0']
    #allocation3 [shape = 's32[2]{0}', space=sflag, size = 0x8, scoped, tag = 'scoped memory for tpu_custom_call.1']
    #allocation4 [shape = 's32[2]{0}', space=sflag, size = 0x8, scoped, tag = 'scoped memory for tpu_custom_call.1']
    #allocation5 [shape = 'u8[2048]{0}', space=vmem, size = 0x800, scoped, tag = 'output window, operand 0']
    %6 = vsyncpa [#allocation3], 0
    %s7 = scalar_lea.sflag [#allocation3], 1
    %8 = vsyncpa %s7, 0
    %9 = vsyncpa [#allocation4], 0
    %s10 = scalar_lea.sflag [#allocation4], 1
    %11 = vsyncpa %s10, 0
    loop: start=0, step=1, limit=4
    $region2: #{tpu_custom_call.1} parent=1 // loop_pre_header
      _
    $region3: #{tpu_custom_call.1} parent=1 // loop_header
      %s13 = sphi 0, %s17
      %p14 = scmp.ge.s32.totalorder %s13, 4
      %s20 = sphi 0, %s32
      %s21 = sphi 0, %s28
      %s22 = sphi 0, %s20
      %s23 = sphi 0, %s21
      %s24 = sphi 0, %s22
      %s25 = sphi 0, %s23
      %s37 = sphi 0, %s39
      %s40 = sphi 0, %s37
      %s41 = sphi 0, %s40
      %s57 = sphi 0, %s41
      %s65 = sphi 0, %s67
      %s68 = sphi 0, %s65
      %s69 = sphi 0, %s68
      %s85 = sphi 0, %s69
    $region4: #{tpu_custom_call.1} parent=1 // loop_header_branch
      %16 = sbr.rel (%p14) target = $region8
    $region5: #{tpu_custom_call.1} parent=1 // loop_body
      %s18 = ssub.s32 %s13, 1
      %s19 = ssub.s32 %s13, 2
      %s26 = sadd.s32 1, %s21
      %p27 = scmp.ge.s32.totalorder %s26, 1
      %s28 = scalar_select %p27, 0, %s26
      %s29 = sadd.s32 1, %s20
      %s30 = scalar_select %p27, %s29, %s20
      %p31 = scmp.ge.s32.totalorder %s30, 2
      %s32 = scalar_select %p31, 0, %s30
      %s33 = ssub.s32 %s20, %s32
      %s34 = ssub.s32 %s21, %s28
      %s35 = sor.u32 %s33, %s34
      %p36 = scmp.eq.s32.totalorder %s35, 0
      %s38 = sadd.s32 %s37, 1
      %s39 = scalar_select %p36, %s37, %s38
      %p42 = pneg %p36
      %p43 = scmp.eq.s32.totalorder %s13, 1
      %p44 = por %p42, %p43
      %p45 = scmp.ne.s32.totalorder %s37, %s40
      %p46 = scmp.eq.s32.totalorder %s13, 0
      %p47 = por %p45, %p46
      %p48 = scmp.ne.s32.totalorder %s37, %s40
      %p49 = scmp.eq.s32.totalorder %s18, 1
      %p50 = por %p48, %p49
      %p51 = scmp.ne.s32.totalorder %s40, %s41
      %p52 = scmp.eq.s32.totalorder %s18, 0
      %p53 = por %p51, %p52
      %p54 = scmp.ne.s32.totalorder %s40, %s41
      %p55 = scmp.eq.s32.totalorder %s19, 1
      %p56 = por %p54, %p55
      %p58 = scmp.ne.s32.totalorder %s41, %s57
      %p59 = scmp.eq.s32.totalorder %s19, 0
      %p60 = por %p58, %p59
      %s61 = ssub.s32 %s20, %s32
      %s62 = ssub.s32 %s21, %s28
      %s63 = sor.u32 %s61, %s62
      %p64 = scmp.eq.s32.totalorder %s63, 0
      %s66 = sadd.s32 %s65, 1
      %s67 = scalar_select %p64, %s65, %s66
      %p70 = pneg %p64
      %p71 = scmp.eq.s32.totalorder %s13, 1
      %p72 = por %p70, %p71
      %p73 = scmp.ne.s32.totalorder %s65, %s68
      %p74 = scmp.eq.s32.totalorder %s13, 0
      %p75 = por %p73, %p74
      %p76 = scmp.ne.s32.totalorder %s65, %s68
      %p77 = scmp.eq.s32.totalorder %s18, 1
      %p78 = por %p76, %p77
      %p79 = scmp.ne.s32.totalorder %s68, %s69
      %p80 = scmp.eq.s32.totalorder %s18, 0
      %p81 = por %p79, %p80
      %p82 = scmp.ne.s32.totalorder %s68, %s69
      %p83 = scmp.eq.s32.totalorder %s19, 1
      %p84 = por %p82, %p83
      %p86 = scmp.ne.s32.totalorder %s69, %s85
      %p87 = scmp.eq.s32.totalorder %s19, 0
      %p88 = por %p86, %p87
      %p89 = scmp.le.s32.totalorder 1, %s13
      %p90 = scmp.lt.s32.totalorder %s13, 3
      %p91 = pnand %p89, %p90
      %p92 = pneg %p91
      // Predicated region
      $region9: #{tpu_custom_call.1} parent=5 // pred_check
        _
      $region10: #{tpu_custom_call.1} parent=5 // pred_check_branch
        %94 = sbr.rel (%p91) target = $region12
      $region11: #{tpu_custom_call.1} parent=5 // pred_region
        %s95 = ssub.s32 %s13, 1
      $region12: #{tpu_custom_call.1} parent=5 // pred_fallthru
        _
      %p96 = scmp.lt.s32.totalorder %s13, 2
      // Predicated region
      $region13: #{tpu_custom_call.1} parent=5 // pred_check
        %p97 = pneg %p96
      $region14: #{tpu_custom_call.1} parent=5 // pred_check_branch
        %99 = sbr.rel (%p97) target = $region16
      $region15: #{tpu_custom_call.1} parent=5 // pred_region
        // Predicated region
        $region17: #{tpu_custom_call.1} parent=15 // pred_check
          %p100 = pneg %p47
        $region18: #{tpu_custom_call.1} parent=15 // pred_check_branch
          %102 = sbr.rel (%p100) target = $region20
        $region19: #{tpu_custom_call.1} parent=15 // pred_region
          %s103 = sand.u32 %s37, 1
          %s104 = scalar_lea.sflag [#allocation3], %s103
          %s105 = sand.u32 %s37, 1
          %s106 = smul.addr %s105, 768
          %s107 = scalar_lea.vmem [#allocation2], %s106
          %s108 = smul.u32 2, %s20
          %s110 = ssub.s32 12288, 12288
          %111 = vsyncadd %s104, %s110
          %s112 = smul.addr %s108, 48
          %s113 = sadd.s32 %s21, %s112
          %s114 = smul.addr %s113, 128
          %s115 = scalar_lea.hbm %s0, %s114
          %s116 = sshll.u32 %s107, 4
          %s117 = int_to_ptr.vmem [resolvable:$true] %s116
          %122 = dma.hbm_to_vmem [thread:$0]  %s115, 12288, %s117, %s104, 128, 128, 8
        $region20: #{tpu_custom_call.1} parent=15 // pred_fallthru
          _
      $region16: #{tpu_custom_call.1} parent=5 // pred_fallthru
        _
      %p123 = scmp.le.s32.totalorder 1, %s13
      %p124 = scmp.lt.s32.totalorder %s13, 3
      %p125 = pnand %p123, %p124
      %p126 = pneg %p125
      // Predicated region
      $region21: #{tpu_custom_call.1} parent=5 // pred_check
        _
      $region22: #{tpu_custom_call.1} parent=5 // pred_check_branch
        %128 = sbr.rel (%p125) target = $region24
      $region23: #{tpu_custom_call.1} parent=5 // pred_region
        %s129 = ssub.s32 %s13, 1
        %s130 = sand.u32 %s40, 1
        %s131 = scalar_lea.sflag [#allocation3], %s130
        %s132 = sand.u32 %s40, 1
        %s133 = smul.addr %s132, 768
        %s134 = scalar_lea.vmem [#allocation2], %s133
        // Predicated region
        $region25: #{tpu_custom_call.1} parent=23 // pred_check
          %p135 = pneg %p53
        $region26: #{tpu_custom_call.1} parent=23 // pred_check_branch
          %137 = sbr.rel (%p135) target = $region28
        $region27: #{tpu_custom_call.1} parent=23 // pred_region
          %138 = dma.done %s131, 12288
        $region28: #{tpu_custom_call.1} parent=23 // pred_fallthru
          _
        %s139 = sand.u32 %s40, 1
        %s140 = scalar_lea.sflag [#allocation3], %s139
        %s141 = sand.u32 %s40, 1
        %s142 = smul.addr %s141, 768
        %s143 = scalar_lea.vmem [#allocation2], %s142
        %p144 = pneg %p53
        %p145 = pneg %p50
        %p146 = pneg %p81
        %p147 = pneg %p78
        %s148 = sand.u32 %s68, 1
        %s149 = scalar_lea.sflag [#allocation4], %s148
        %s150 = sand.u32 %s68, 1
        %s151 = smul.addr %s150, 2
        %s152 = scalar_lea.vmem [#allocation5], %s151
        %s153 = smul.u32 2, %s22
        %s154 = smul.u32 2, %s22
        %v155 = vld [vmem:[%s134] sm:$0xff]
        %v156 = vld [vmem:[%s134 + $0x8] sm:$0xff]
        %v157 = vld [vmem:[%s134 + $0x10] sm:$0xff]
        %v158 = vld [vmem:[%s134 + $0x18] sm:$0xff]
        %v159 = vld [vmem:[%s134 + $0x20] sm:$0xff]
        %v160 = vld [vmem:[%s134 + $0x28] sm:$0xff]
        %v161 = vld [vmem:[%s134 + $0x30] sm:$0xff]
        %v162 = vld [vmem:[%s134 + $0x38] sm:$0xff]
        %v163 = vld [vmem:[%s134 + $0x40] sm:$0xff]
        %v164 = vld [vmem:[%s134 + $0x48] sm:$0xff]
        %v165 = vld [vmem:[%s134 + $0x50] sm:$0xff]
        %v166 = vld [vmem:[%s134 + $0x58] sm:$0xff]
        %v167 = vld [vmem:[%s134 + $0x60] sm:$0xff]
        %v168 = vld [vmem:[%s134 + $0x68] sm:$0xff]
        %v169 = vld [vmem:[%s134 + $0x70] sm:$0xff]
        %v170 = vld [vmem:[%s134 + $0x78] sm:$0xff]
        %v171 = vld [vmem:[%s134 + $0x80] sm:$0xff]
        %v172 = vld [vmem:[%s134 + $0x88] sm:$0xff]
        %v173 = vld [vmem:[%s134 + $0x90] sm:$0xff]
        %v174 = vld [vmem:[%s134 + $0x98] sm:$0xff]
        %v175 = vld [vmem:[%s134 + $0xa0] sm:$0xff]
        %v176 = vld [vmem:[%s134 + $0xa8] sm:$0xff]
        %v177 = vld [vmem:[%s134 + $0xb0] sm:$0xff]
        %v178 = vld [vmem:[%s134 + $0xb8] sm:$0xff]
        %v179 = vld [vmem:[%s134 + $0xc0] sm:$0xff]
        %v180 = vld [vmem:[%s134 + $0xc8] sm:$0xff]
        %v181 = vld [vmem:[%s134 + $0xd0] sm:$0xff]
        %v182 = vld [vmem:[%s134 + $0xd8] sm:$0xff]
        %v183 = vld [vmem:[%s134 + $0xe0] sm:$0xff]
        %v184 = vld [vmem:[%s134 + $0xe8] sm:$0xff]
        %v185 = vld [vmem:[%s134 + $0xf0] sm:$0xff]
        %v186 = vld [vmem:[%s134 + $0xf8] sm:$0xff]
        %v187 = vld [vmem:[%s134 + $0x100] sm:$0xff]
        %v188 = vld [vmem:[%s134 + $0x108] sm:$0xff]
        %v189 = vld [vmem:[%s134 + $0x110] sm:$0xff]
        %v190 = vld [vmem:[%s134 + $0x118] sm:$0xff]
        %v191 = vld [vmem:[%s134 + $0x120] sm:$0xff]
        %v192 = vld [vmem:[%s134 + $0x128] sm:$0xff]
        %v193 = vld [vmem:[%s134 + $0x130] sm:$0xff]
        %v194 = vld [vmem:[%s134 + $0x138] sm:$0xff]
        %v195 = vld [vmem:[%s134 + $0x140] sm:$0xff]
        %v196 = vld [vmem:[%s134 + $0x148] sm:$0xff]
        %v197 = vld [vmem:[%s134 + $0x150] sm:$0xff]
        %v198 = vld [vmem:[%s134 + $0x158] sm:$0xff]
        %v199 = vld [vmem:[%s134 + $0x160] sm:$0xff]
        %v200 = vld [vmem:[%s134 + $0x168] sm:$0xff]
        %v201 = vld [vmem:[%s134 + $0x170] sm:$0xff]
        %v202 = vld [vmem:[%s134 + $0x178] sm:$0xff]
        %v203 = vld [vmem:[%s134 + $0x180] sm:$0xff]
        %v204 = vld [vmem:[%s134 + $0x188] sm:$0xff]
        %v205 = vld [vmem:[%s134 + $0x190] sm:$0xff]
        %v206 = vld [vmem:[%s134 + $0x198] sm:$0xff]
        %v207 = vld [vmem:[%s134 + $0x1a0] sm:$0xff]
        %v208 = vld [vmem:[%s134 + $0x1a8] sm:$0xff]
        %v209 = vld [vmem:[%s134 + $0x1b0] sm:$0xff]
        %v210 = vld [vmem:[%s134 + $0x1b8] sm:$0xff]
        %v211 = vld [vmem:[%s134 + $0x1c0] sm:$0xff]
        %v212 = vld [vmem:[%s134 + $0x1c8] sm:$0xff]
        %v213 = vld [vmem:[%s134 + $0x1d0] sm:$0xff]
        %v214 = vld [vmem:[%s134 + $0x1d8] sm:$0xff]
        %v215 = vld [vmem:[%s134 + $0x1e0] sm:$0xff]
        %v216 = vld [vmem:[%s134 + $0x1e8] sm:$0xff]
        %v217 = vld [vmem:[%s134 + $0x1f0] sm:$0xff]
        %v218 = vld [vmem:[%s134 + $0x1f8] sm:$0xff]
        %v219 = vld [vmem:[%s134 + $0x200] sm:$0xff]
        %v220 = vld [vmem:[%s134 + $0x208] sm:$0xff]
        %v221 = vld [vmem:[%s134 + $0x210] sm:$0xff]
        %v222 = vld [vmem:[%s134 + $0x218] sm:$0xff]
        %v223 = vld [vmem:[%s134 + $0x220] sm:$0xff]
        %v224 = vld [vmem:[%s134 + $0x228] sm:$0xff]
        %v225 = vld [vmem:[%s134 + $0x230] sm:$0xff]
        %v226 = vld [vmem:[%s134 + $0x238] sm:$0xff]
        %v227 = vld [vmem:[%s134 + $0x240] sm:$0xff]
        %v228 = vld [vmem:[%s134 + $0x248] sm:$0xff]
        %v229 = vld [vmem:[%s134 + $0x250] sm:$0xff]
        %v230 = vld [vmem:[%s134 + $0x258] sm:$0xff]
        %v231 = vld [vmem:[%s134 + $0x260] sm:$0xff]
        %v232 = vld [vmem:[%s134 + $0x268] sm:$0xff]
        %v233 = vld [vmem:[%s134 + $0x270] sm:$0xff]
        %v234 = vld [vmem:[%s134 + $0x278] sm:$0xff]
        %v235 = vld [vmem:[%s134 + $0x280] sm:$0xff]
        %v236 = vld [vmem:[%s134 + $0x288] sm:$0xff]
        %v237 = vld [vmem:[%s134 + $0x290] sm:$0xff]
        %v238 = vld [vmem:[%s134 + $0x298] sm:$0xff]
        %v239 = vld [vmem:[%s134 + $0x2a0] sm:$0xff]
        %v240 = vld [vmem:[%s134 + $0x2a8] sm:$0xff]
        %v241 = vld [vmem:[%s134 + $0x2b0] sm:$0xff]
        %v242 = vld [vmem:[%s134 + $0x2b8] sm:$0xff]
        %v243 = vld [vmem:[%s134 + $0x2c0] sm:$0xff]
        %v244 = vld [vmem:[%s134 + $0x2c8] sm:$0xff]
        %v245 = vld [vmem:[%s134 + $0x2d0] sm:$0xff]
        %v246 = vld [vmem:[%s134 + $0x2d8] sm:$0xff]
        %v247 = vld [vmem:[%s134 + $0x2e0] sm:$0xff]
        %v248 = vld [vmem:[%s134 + $0x2e8] sm:$0xff]
        %v249 = vld [vmem:[%s134 + $0x2f0] sm:$0xff]
        %v250 = vld [vmem:[%s134 + $0x2f8] sm:$0xff]
        %v251 = vadd.f32 %v155, %v156
        %v252 = vadd.f32 %v251, %v157
        %v253 = vadd.f32 %v252, %v158
        %v254 = vadd.f32 %v253, %v159
        %v255 = vadd.f32 %v254, %v160
        %v256 = vadd.f32 %v255, %v161
        %v257 = vadd.f32 %v256, %v162
        %v258 = vadd.f32 %v257, %v163
        %v259 = vadd.f32 %v258, %v164
        %v260 = vadd.f32 %v259, %v165
        %v261 = vadd.f32 %v260, %v166
        %v262 = vadd.f32 %v261, %v167
        %v263 = vadd.f32 %v262, %v168
        %v264 = vadd.f32 %v263, %v169
        %v265 = vadd.f32 %v264, %v170
        %v266 = vadd.f32 %v265, %v171
        %v267 = vadd.f32 %v266, %v172
        %v268 = vadd.f32 %v267, %v173
        %v269 = vadd.f32 %v268, %v174
        %v270 = vadd.f32 %v269, %v175
        %v271 = vadd.f32 %v270, %v176
        %v272 = vadd.f32 %v271, %v177
        %v273 = vadd.f32 %v272, %v178
        %v274 = vadd.f32 %v273, %v179
        %v275 = vadd.f32 %v274, %v180
        %v276 = vadd.f32 %v275, %v181
        %v277 = vadd.f32 %v276, %v182
        %v278 = vadd.f32 %v277, %v183
        %v279 = vadd.f32 %v278, %v184
        %v280 = vadd.f32 %v279, %v185
        %v281 = vadd.f32 %v280, %v186
        %v282 = vadd.f32 %v281, %v187
        %v283 = vadd.f32 %v282, %v188
        %v284 = vadd.f32 %v283, %v189
        %v285 = vadd.f32 %v284, %v190
        %v286 = vadd.f32 %v285, %v191
        %v287 = vadd.f32 %v286, %v192
        %v288 = vadd.f32 %v287, %v193
        %v289 = vadd.f32 %v288, %v194
        %v290 = vadd.f32 %v289, %v195
        %v291 = vadd.f32 %v290, %v196
        %v292 = vadd.f32 %v291, %v197
        %v293 = vadd.f32 %v292, %v198
        %v294 = vadd.f32 %v293, %v199
        %v295 = vadd.f32 %v294, %v200
        %v296 = vadd.f32 %v295, %v201
        %v297 = vadd.f32 %v296, %v202
        %v298 = vrot.slane %v297, 4
        %v299 = vadd.f32 %v297, %v298
        %v300 = vrot.slane %v299, 2
        %v301 = vadd.f32 %v299, %v300
        %v302 = vrot.slane %v301, 1
        %v303 = vadd.f32 %v301, %v302
        %v304 = vadd.f32 %v203, %v204
        %v305 = vadd.f32 %v304, %v205
        %v306 = vadd.f32 %v305, %v206
        %v307 = vadd.f32 %v306, %v207
        %v308 = vadd.f32 %v307, %v208
        %v309 = vadd.f32 %v308, %v209
        %v310 = vadd.f32 %v309, %v210
        %v311 = vadd.f32 %v310, %v211
        %v312 = vadd.f32 %v311, %v212
        %v313 = vadd.f32 %v312, %v213
        %v314 = vadd.f32 %v313, %v214
        %v315 = vadd.f32 %v314, %v215
        %v316 = vadd.f32 %v315, %v216
        %v317 = vadd.f32 %v316, %v217
        %v318 = vadd.f32 %v317, %v218
        %v319 = vadd.f32 %v318, %v219
        %v320 = vadd.f32 %v319, %v220
        %v321 = vadd.f32 %v320, %v221
        %v322 = vadd.f32 %v321, %v222
        %v323 = vadd.f32 %v322, %v223
        %v324 = vadd.f32 %v323, %v224
        %v325 = vadd.f32 %v324, %v225
        %v326 = vadd.f32 %v325, %v226
        %v327 = vadd.f32 %v326, %v227
        %v328 = vadd.f32 %v327, %v228
        %v329 = vadd.f32 %v328, %v229
        %v330 = vadd.f32 %v329, %v230
        %v331 = vadd.f32 %v330, %v231
        %v332 = vadd.f32 %v331, %v232
        %v333 = vadd.f32 %v332, %v233
        %v334 = vadd.f32 %v333, %v234
        %v335 = vadd.f32 %v334, %v235
        %v336 = vadd.f32 %v335, %v236
        %v337 = vadd.f32 %v336, %v237
        %v338 = vadd.f32 %v337, %v238
        %v339 = vadd.f32 %v338, %v239
        %v340 = vadd.f32 %v339, %v240
        %v341 = vadd.f32 %v340, %v241
        %v342 = vadd.f32 %v341, %v242
        %v343 = vadd.f32 %v342, %v243
        %v344 = vadd.f32 %v343, %v244
        %v345 = vadd.f32 %v344, %v245
        %v346 = vadd.f32 %v345, %v246
        %v347 = vadd.f32 %v346, %v247
        %v348 = vadd.f32 %v347, %v248
        %v349 = vadd.f32 %v348, %v249
        %v350 = vadd.f32 %v349, %v250
        %v351 = vrot.slane %v350, 4
        %v352 = vadd.f32 %v350, %v351
        %v353 = vrot.slane %v352, 2
        %v354 = vadd.f32 %v352, %v353
        %v355 = vrot.slane %v354, 1
        %v356 = vadd.f32 %v354, %v355
        %357 = vst [vmem:[%s152] sm:$0x1] %v303
        %358 = vst [vmem:[%s152 + $0x1] sm:$0x1] %v356
        %s359 = sand.u32 %s68, 1
        %s360 = scalar_lea.sflag [#allocation4], %s359
        %s361 = sand.u32 %s68, 1
        %s362 = smul.addr %s361, 2
        %s363 = scalar_lea.vmem [#allocation5], %s362
        // Predicated region
        $region29: #{tpu_custom_call.1} parent=23 // pred_check
          %p364 = pneg %p78
        $region30: #{tpu_custom_call.1} parent=23 // pred_check_branch
          %366 = sbr.rel (%p364) target = $region32
        $region31: #{tpu_custom_call.1} parent=23 // pred_region
          %s367 = smul.u32 2, %s22
          %s369 = ssub.s32 32, 32
          %370 = vsyncadd %s360, %s369
          %s371 = sadd.s32 %s23, %s367
          %s372 = smul.addr %s371, 16
          %s373 = scalar_lea.hbm %s1, %s372
          %s374 = sshll.u32 %s363, 4
          %s375 = int_to_ptr.vmem [resolvable:$true] %s374
          %380 = dma.vmem_to_hbm [thread:$0]  %s375, 32, %s373, %s360, 16, 16, 1
        $region32: #{tpu_custom_call.1} parent=23 // pred_fallthru
          _
      $region24: #{tpu_custom_call.1} parent=5 // pred_fallthru
        _
      %p381 = scmp.le.s32.totalorder 2, %s13
      // Predicated region
      $region33: #{tpu_custom_call.1} parent=5 // pred_check
        %p382 = pneg %p381
      $region34: #{tpu_custom_call.1} parent=5 // pred_check_branch
        %384 = sbr.rel (%p382) target = $region36
      $region35: #{tpu_custom_call.1} parent=5 // pred_region
        %s385 = ssub.s32 %s13, 2
        // Predicated region
        $region37: #{tpu_custom_call.1} parent=35 // pred_check
          %p386 = pneg %p84
        $region38: #{tpu_custom_call.1} parent=35 // pred_check_branch
          %388 = sbr.rel (%p386) target = $region40
        $region39: #{tpu_custom_call.1} parent=35 // pred_region
          %s389 = sand.u32 %s69, 1
          %s390 = scalar_lea.sflag [#allocation4], %s389
          %s391 = sand.u32 %s69, 1
          %s392 = smul.addr %s391, 2
          %s393 = scalar_lea.vmem [#allocation5], %s392
          %394 = dma.done %s390, 32
        $region40: #{tpu_custom_call.1} parent=35 // pred_fallthru
          _
      $region36: #{tpu_custom_call.1} parent=5 // pred_fallthru
        _
    $region6: #{tpu_custom_call.1} parent=1 // loop_footer
      %s17 = sadd.s32 1, %s13
    $region7: #{tpu_custom_call.1} parent=1 // loop_footer_branch
      %12 = sbr.rel target = $region3
    $region8: #{tpu_custom_call.1} parent=1 // loop_exit
      _
    %395 = vsyncpa [#allocation3], 1
    %s396 = scalar_lea.sflag [#allocation3], 1
    %397 = vsyncpa %s396, 1
    %398 = vsyncpa [#allocation4], 1
    %s399 = scalar_lea.sflag [#allocation4], 1
    %400 = vsyncpa %s399, 1

</llo_original>
